<compile_context>
chip_gen: v5e
topology: v5e:2x2
jax: 0.10.0
libtpu: 0.0.40
codegen_flags: <defaults>
</compile_context>

<pallas_src>
import functools

import numpy as np
import jax
import jax.numpy as jnp
from jax.experimental import pallas as pl
from jax.experimental.pallas import tpu as pltpu


def _round_up(n: int, m: int) -> int:
    return ((n + m - 1) // m) * m


def _mlp_kernel(x_ref, w_first_ref, b_first_ref, w_rest_ref, b_rest_ref,
                o_ref, h_ref):
    """One (batch-tile, layer) grid step.

    x_ref:       (tm, in_pad)   bf16  input batch tile (constant over the layer axis)
    w_first_ref: (in_pad, F)    bf16  first layer weight (in, out)
    b_first_ref: (1, F)         f32   first layer bias
    w_rest_ref:  (1, F, F)      bf16  weight of layer l (l >= 1)
    b_rest_ref:  (1, 1, F)      f32   bias of layer l  (l >= 1)
    o_ref:       (tm, F)        f32   final activations (written on last layer)
    h_ref:       (tm, F)        bf16  VMEM scratch carrying activations across layers
    """
    l = pl.program_id(1)
    last = pl.num_programs(1) - 1

    @pl.when(l == 0)
    def _first_layer():
        acc = jnp.dot(x_ref[...], w_first_ref[...],
                      preferred_element_type=jnp.float32)      # MXU bf16 -> f32
        act = jnp.maximum(acc + b_first_ref[...], 0.0)         # bias + ReLU in f32
        h_ref[...] = act.astype(h_ref.dtype)                   # bf16 carry

        @pl.when(l == last)                                    # num_layers == 1
        def _():
            o_ref[...] = act

    @pl.when(l > 0)
    def _rest_layers():
        acc = jnp.dot(h_ref[...], w_rest_ref[0],
                      preferred_element_type=jnp.float32)
        act = jnp.maximum(acc + b_rest_ref[0], 0.0)
        h_ref[...] = act.astype(h_ref.dtype)

        @pl.when(l == last)
        def _():
            o_ref[...] = act                                   # final result in f32


def pack_params(params, lane: int = 128):
    """Host-side one-shot packing.

    first layer -> w_first [in_pad, F] / b_first [1, F]
    layers 1..L-1 -> w_rest [max(L-1,1), F, F] / b_rest [max(L-1,1), 1, F]
    with F = round_up(max over hidden/output dims, 128), in_pad = round_up(input, 128).
    """
    in_dim = params[0][0].shape[0]
    in_pad = _round_up(in_dim, lane)
    rest_dims = [params[0][0].shape[1]]
    for (w, _) in params[1:]:
        rest_dims += [w.shape[0], w.shape[1]]
    feat = _round_up(max(rest_dims), lane)

    w0, b0 = params[0]
    w_first = np.zeros((in_pad, feat), np.float32)
    w_first[:w0.shape[0], :w0.shape[1]] = np.asarray(w0)
    b_first = np.zeros((1, feat), np.float32)
    b_first[0, :b0.shape[0]] = np.asarray(b0)

    n_rest = max(len(params) - 1, 1)                 # keep >=1 block for the grid
    w_rest = np.zeros((n_rest, feat, feat), np.float32)
    b_rest = np.zeros((n_rest, 1, feat), np.float32)
    for i, (w, b) in enumerate(params[1:]):
        w_rest[i, :w.shape[0], :w.shape[1]] = np.asarray(w)
        b_rest[i, 0, :b.shape[0]] = np.asarray(b)

    out_dim = params[-1][0].shape[1]
    return (jnp.asarray(w_first, jnp.bfloat16),
            jnp.asarray(b_first, jnp.float32),
            jnp.asarray(w_rest, jnp.bfloat16),
            jnp.asarray(b_rest, jnp.float32),
            out_dim)


@functools.partial(jax.jit, static_argnames=("out_dim", "num_layers"))
def fully_connected_forward(x, w_first, b_first, w_rest, b_rest, *,
                            out_dim, num_layers):
    """for layer in layers: x = relu(layer(x)) -- fused into one pallas_call."""
    batch, in_dim = x.shape
    in_pad, feat = w_first.shape

    # Batch padding: multiple of 16 sublanes (bf16 packing); tile at 256 rows when
    # the batch is large so the "parallel" axis can shard across v7x's 2 TCs.
    b_pad = _round_up(max(batch, 16), 16)
    if b_pad > 256:
        tm = 256
        b_pad = _round_up(b_pad, tm)
    else:
        tm = b_pad
    num_b = b_pad // tm

    x_pad = jnp.zeros((b_pad, in_pad), jnp.bfloat16)
    x_pad = x_pad.at[:batch, :in_dim].set(x.astype(jnp.bfloat16))

    rest_idx = lambda b, l: (jnp.maximum(l - 1, 0), 0, 0)   # layer l uses rest[l-1]

    out_pad = pl.pallas_call(
        _mlp_kernel,
        out_shape=jax.ShapeDtypeStruct((b_pad, feat), jnp.float32),
        grid_spec=pltpu.PrefetchScalarGridSpec(
            num_scalar_prefetch=0,
            grid=(num_b, num_layers),
            in_specs=[
                pl.BlockSpec((tm, in_pad), lambda b, l: (b, 0)),        # x
                pl.BlockSpec((in_pad, feat), lambda b, l: (0, 0)),      # w_first
                pl.BlockSpec((1, feat), lambda b, l: (0, 0)),           # b_first
                pl.BlockSpec((1, feat, feat), rest_idx),                # w_rest[l-1]
                pl.BlockSpec((1, 1, feat), rest_idx),                   # b_rest[l-1]
            ],
            out_specs=pl.BlockSpec((tm, feat), lambda b, l: (b, 0)),
            scratch_shapes=[pltpu.VMEM((tm, feat), jnp.bfloat16)],      # activation carry
        ),
        compiler_params=pltpu.CompilerParams(
            dimension_semantics=("parallel", "arbitrary")),
    )(x_pad, w_first, b_first, w_rest, b_rest)

    return out_pad[:batch, :out_dim]


def init_fully_connected_params(key, input_dim, output_dim, num_layers,
                                inner_layer=200):
    """Deterministic init matching the torch module's layer structure
    (first: in->inner, middle: inner->inner, last: inner->out)."""
    dims = []
    for i in range(num_layers):
        if i == 0:
            dims.append((input_dim, inner_layer))
        elif i == num_layers - 1:
            dims.append((inner_layer, output_dim))
        else:
            dims.append((inner_layer, inner_layer))
    params = []
    for (fan_in, fan_out) in dims:
        key, kw, kb = jax.random.split(key, 3)
        bound = 1.0 / float(fan_in) ** 0.5
        # stored as (in, out) == torch weight (out, in) transposed
        w = jax.random.uniform(kw, (fan_in, fan_out), jnp.float32,
                               minval=-bound, maxval=bound)
        b = jax.random.uniform(kb, (fan_out,), jnp.float32,
                               minval=-bound, maxval=bound)
        params.append((w, b))
    return params


if __name__ == "__main__":
    # batch=8, input=16, hidden=32, output=8, 3 layers, ReLU after every layer
    # (matches the torch forward, which activates the final Linear as well).
    batch, input_dim, output_dim, num_layers, inner = 8, 16, 8, 3, 32

    key = jax.random.PRNGKey(0)
    key, kx = jax.random.split(key)
    x = jax.random.normal(kx, (batch, input_dim), jnp.float32)

    params = init_fully_connected_params(key, input_dim, output_dim,
                                         num_layers, inner_layer=inner)
    w_first, b_first, w_rest, b_rest, out_dim = pack_params(params)

    y = fully_connected_forward(x, w_first, b_first, w_rest, b_rest,
                                out_dim=out_dim, num_layers=num_layers)
    y = jax.block_until_ready(y)

    # Pure-JAX reference with the same bf16 operand rounding / f32 accumulation.
    ref = x
    for (w, b) in params:
        ref = jnp.maximum(
            jnp.dot(ref.astype(jnp.bfloat16), w.astype(jnp.bfloat16),
                    preferred_element_type=jnp.float32) + b, 0.0)

    assert y.shape == (batch, output_dim)
    err = float(jnp.max(jnp.abs(y - ref)))
    assert jnp.allclose(y, ref, atol=2e-3, rtol=2e-3), f"max abs err = {err}"

    print("KERNEL_OK")
</pallas_src>

<mosaic_0001>
module attributes {stable_mosaic.version = 11 : i64} {
  func.func @_mlp_kernel(%arg0: i32, %arg1: i32, %arg2: memref<16x128xbf16, #tpu.memory_space<vmem>>, %arg3: memref<128x128xbf16, #tpu.memory_space<vmem>>, %arg4: memref<1x128xf32, #tpu.memory_space<vmem>>, %arg5: memref<1x128x128xbf16, #tpu.memory_space<vmem>>, %arg6: memref<1x1x128xf32, #tpu.memory_space<vmem>>, %arg7: memref<16x128xf32, #tpu.memory_space<vmem>>, %arg8: memref<16x128xbf16, #tpu.memory_space<vmem>>) attributes {dimension_semantics = [#tpu.dimension_semantics<parallel>, #tpu.dimension_semantics<arbitrary>], iteration_bounds = array<i64: 1, 3>, scalar_prefetch = 0 : i64, scratch_operands = 1 : i64, tpu.core_type = #tpu.core_type<tc>, window_params = [{transform_indices = @transform_0, window_bounds = array<i64: 16, 128>}, {pipeline_mode = #tpu.pipeline_mode<synchronous>, transform_indices = @transform_1, window_bounds = array<i64: 128, 128>}, {pipeline_mode = #tpu.pipeline_mode<synchronous>, transform_indices = @transform_2, window_bounds = array<i64: 1, 128>}, {transform_indices = @transform_3, window_bounds = array<i64: 1, 128, 128>}, {transform_indices = @transform_4, window_bounds = array<i64: 1, 1, 128>}, {transform_indices = @transform_5, window_bounds = array<i64: 16, 128>}]} {
    %c0_i32 = arith.constant 0 : i32
    %0 = arith.cmpi eq, %arg1, %c0_i32 : i32
    %1 = arith.extui %0 : i1 to i32
    %c0_i32_0 = arith.constant 0 : i32
    %2 = arith.cmpi ne, %1, %c0_i32_0 : i32
    scf.if %2 {
      %c0 = arith.constant 0 : index
      %c0_3 = arith.constant 0 : index
      %6 = vector.load %arg2[%c0, %c0_3] : memref<16x128xbf16, #tpu.memory_space<vmem>>, vector<16x128xbf16>
      %c0_4 = arith.constant 0 : index
      %c0_5 = arith.constant 0 : index
      %7 = vector.load %arg3[%c0_4, %c0_5] : memref<128x128xbf16, #tpu.memory_space<vmem>>, vector<128x128xbf16>
      %cst = arith.constant dense<0.000000e+00> : vector<16x128xf32>
      %8 = tpu.matmul %6, %7, %cst {dimension_numbers = #tpu.dot_dimension_numbers<[1], [0], [0], [1], [0, 0, 1, 1], [], []>} : vector<16x128xbf16>, vector<128x128xbf16>, vector<16x128xf32> -> vector<16x128xf32>
      %c0_6 = arith.constant 0 : index
      %c0_7 = arith.constant 0 : index
      %9 = vector.load %arg4[%c0_6, %c0_7] : memref<1x128xf32, #tpu.memory_space<vmem>>, vector<1x128xf32>
      %10 = vector.broadcast %9 : vector<1x128xf32> to vector<16x128xf32>
      %11 = arith.addf %8, %10 : vector<16x128xf32>
      %cst_8 = arith.constant 0.000000e+00 : f32
      %12 = vector.broadcast %cst_8 : f32 to vector<16x128xf32>
      %13 = arith.maximumf %11, %12 : vector<16x128xf32>
      %14 = arith.truncf %13 : vector<16x128xf32> to vector<16x128xbf16>
      %c0_9 = arith.constant 0 : index
      %c0_10 = arith.constant 0 : index
      %15 = vector.load %arg8[%c0_9, %c0_10] : memref<16x128xbf16, #tpu.memory_space<vmem>>, vector<16x128xbf16>
      tpu.vector_store %arg8[%c0_9, %c0_10], %14 {strides = array<i32>} : memref<16x128xbf16, #tpu.memory_space<vmem>>, vector<16x128xbf16>,
      %c2_i32 = arith.constant 2 : i32
      %16 = arith.cmpi eq, %arg1, %c2_i32 : i32
      %17 = arith.extui %16 : i1 to i32
      %c0_i32_11 = arith.constant 0 : i32
      %18 = arith.cmpi ne, %17, %c0_i32_11 : i32
      scf.if %18 {
        %c0_12 = arith.constant 0 : index
        %c0_13 = arith.constant 0 : index
        %19 = vector.load %arg7[%c0_12, %c0_13] : memref<16x128xf32, #tpu.memory_space<vmem>>, vector<16x128xf32>
        tpu.vector_store %arg7[%c0_12, %c0_13], %13 {strides = array<i32>} : memref<16x128xf32, #tpu.memory_space<vmem>>, vector<16x128xf32>,
      } else {
      }
    } else {
    }
    %c0_i32_1 = arith.constant 0 : i32
    %3 = arith.cmpi sgt, %arg1, %c0_i32_1 : i32
    %4 = arith.extui %3 : i1 to i32
    %c0_i32_2 = arith.constant 0 : i32
    %5 = arith.cmpi ne, %4, %c0_i32_2 : i32
    scf.if %5 {
      %c0 = arith.constant 0 : index
      %c0_3 = arith.constant 0 : index
      %6 = vector.load %arg8[%c0, %c0_3] : memref<16x128xbf16, #tpu.memory_space<vmem>>, vector<16x128xbf16>
      %c0_4 = arith.constant 0 : index
      %c0_5 = arith.constant 0 : index
      %c0_6 = arith.constant 0 : index
      %7 = vector.load %arg5[%c0_4, %c0_5, %c0_6] : memref<1x128x128xbf16, #tpu.memory_space<vmem>>, vector<1x128x128xbf16>
      %8 = vector.shape_cast %7 : vector<1x128x128xbf16> to vector<128x128xbf16>
      %cst = arith.constant dense<0.000000e+00> : vector<16x128xf32>
      %9 = tpu.matmul %6, %8, %cst {dimension_numbers = #tpu.dot_dimension_numbers<[1], [0], [0], [1], [0, 0, 1, 1], [], []>} : vector<16x128xbf16>, vector<128x128xbf16>, vector<16x128xf32> -> vector<16x128xf32>
      %c0_7 = arith.constant 0 : index
      %c0_8 = arith.constant 0 : index
      %c0_9 = arith.constant 0 : index
      %10 = vector.load %arg6[%c0_7, %c0_8, %c0_9] : memref<1x1x128xf32, #tpu.memory_space<vmem>>, vector<1x1x128xf32>
      %11 = vector.shape_cast %10 : vector<1x1x128xf32> to vector<1x128xf32>
      %12 = vector.broadcast %11 : vector<1x128xf32> to vector<16x128xf32>
      %13 = arith.addf %9, %12 : vector<16x128xf32>
      %cst_10 = arith.constant 0.000000e+00 : f32
      %14 = vector.broadcast %cst_10 : f32 to vector<16x128xf32>
      %15 = arith.maximumf %13, %14 : vector<16x128xf32>
      %16 = arith.truncf %15 : vector<16x128xf32> to vector<16x128xbf16>
      %c0_11 = arith.constant 0 : index
      %c0_12 = arith.constant 0 : index
      %17 = vector.load %arg8[%c0_11, %c0_12] : memref<16x128xbf16, #tpu.memory_space<vmem>>, vector<16x128xbf16>
      tpu.vector_store %arg8[%c0_11, %c0_12], %16 {strides = array<i32>} : memref<16x128xbf16, #tpu.memory_space<vmem>>, vector<16x128xbf16>,
      %c2_i32 = arith.constant 2 : i32
      %18 = arith.cmpi eq, %arg1, %c2_i32 : i32
      %19 = arith.extui %18 : i1 to i32
      %c0_i32_13 = arith.constant 0 : i32
      %20 = arith.cmpi ne, %19, %c0_i32_13 : i32
      scf.if %20 {
        %c0_14 = arith.constant 0 : index
        %c0_15 = arith.constant 0 : index
        %21 = vector.load %arg7[%c0_14, %c0_15] : memref<16x128xf32, #tpu.memory_space<vmem>>, vector<16x128xf32>
        tpu.vector_store %arg7[%c0_14, %c0_15], %15 {strides = array<i32>} : memref<16x128xf32, #tpu.memory_space<vmem>>, vector<16x128xf32>,
      } else {
      }
    } else {
    }
    return
  }
  func.func @transform_0(%arg0: i32, %arg1: i32) -> (i32, i32) {
    %c0_i32 = arith.constant 0 : i32
    %c0_i32_0 = arith.constant 0 : i32
    return %arg0, %c0_i32 : i32, i32
  }
  func.func @transform_1(%arg0: i32, %arg1: i32) -> (i32, i32) {
    %c0_i32 = arith.constant 0 : i32
    %c0_i32_0 = arith.constant 0 : i32
    %c0_i32_1 = arith.constant 0 : i32
    return %c0_i32, %c0_i32_0 : i32, i32
  }
  func.func @transform_2(%arg0: i32, %arg1: i32) -> (i32, i32) {
    %c0_i32 = arith.constant 0 : i32
    %c0_i32_0 = arith.constant 0 : i32
    %c0_i32_1 = arith.constant 0 : i32
    return %c0_i32, %c0_i32_0 : i32, i32
  }
  func.func @transform_3(%arg0: i32, %arg1: i32) -> (i32, i32, i32) {
    %c1_i32 = arith.constant 1 : i32
    %0 = arith.subi %arg1, %c1_i32 : i32
    %c0_i32 = arith.constant 0 : i32
    %1 = arith.maxsi %0, %c0_i32 : i32
    %c0_i32_0 = arith.constant 0 : i32
    %c0_i32_1 = arith.constant 0 : i32
    %c0_i32_2 = arith.constant 0 : i32
    return %1, %c0_i32_0, %c0_i32_1 : i32, i32, i32
  }
  func.func @transform_4(%arg0: i32, %arg1: i32) -> (i32, i32, i32) {
    %c1_i32 = arith.constant 1 : i32
    %0 = arith.subi %arg1, %c1_i32 : i32
    %c0_i32 = arith.constant 0 : i32
    %1 = arith.maxsi %0, %c0_i32 : i32
    %c0_i32_0 = arith.constant 0 : i32
    %c0_i32_1 = arith.constant 0 : i32
    %c0_i32_2 = arith.constant 0 : i32
    return %1, %c0_i32_0, %c0_i32_1 : i32, i32, i32
  }
  func.func @transform_5(%arg0: i32, %arg1: i32) -> (i32, i32) {
    %c0_i32 = arith.constant 0 : i32
    %c0_i32_0 = arith.constant 0 : i32
    return %arg0, %c0_i32 : i32, i32
  }
}

</mosaic_0001>

<llo_original>
// kernel: fully_connected_forward.1
$region0: #{fully_connected_forward.1}
  #allocation0 [shape = 'u32[]', space=smem, size = 0x4, offset = 0x4, fixed_abs, tag = 'smem constant byte address 0x4 - core index']
  #allocation1 [shape = 'u32[72,128]{1,0:T(1,128)}', space=vmem, size = 0x9000, scoped, tag = 'internal scratch']
  #allocation2 [shape = 'bf16[16,128]{1,0:T(8,128)(2,1)}', space=vmem, size = 0x1000, scoped, tag = 'scratch operand']
  %s0 = inlined_call_operand.vmem [shape: bf16[16,128], index: 0, kind: input, shape index: {}]
  %s1 = inlined_call_operand.hbm [shape: bf16[128,128], index: 1, kind: input, shape index: {}]
  %s2 = inlined_call_operand.vmem [shape: f32[1,128], index: 2, kind: input, shape index: {}]
  %s3 = inlined_call_operand.hbm [shape: bf16[2,128,128], index: 3, kind: input, shape index: {}]
  %s4 = inlined_call_operand.vmem [shape: f32[2,1,128], index: 4, kind: input, shape index: {}]
  %s5 = inlined_call_operand.vmem [shape: f32[16,128], index: 5, kind: output, shape index: {}]
  %s6 = sld [smem:[#allocation0]]
  $region77: #{fully_connected_forward.1} parent=0
    _
  %s8 = ssub.s32 1, %s6
  %s9 = scalar_select 0, %s8, %s6
  $region1: #{fully_connected_forward.1} parent=0
    #allocation3 [shape = 'u8[32768]{0}', space=vmem, size = 0x8000, scoped, tag = 'input window, operand 1, single buffered']
    #allocation4 [shape = 's32[2]{0}', space=sflag, size = 0x8, scoped, tag = 'scoped memory for fully_connected_forward.1']
    #allocation5 [shape = 'u8[65536]{0}', space=vmem, size = 0x10000, scoped, tag = 'input window, operand 3']
    #allocation6 [shape = 's32[2]{0}', space=sflag, size = 0x8, scoped, tag = 'scoped memory for fully_connected_forward.1']
    %10 = vsyncpa [#allocation4], 0
    %11 = vsyncpa [#allocation6], 0
    %s12 = scalar_lea.sflag [#allocation6], 1
    %13 = vsyncpa %s12, 0
    loop: start=0, step=1, limit=5
    $region2: #{fully_connected_forward.1} parent=1 // loop_pre_header
      _
    $region3: #{fully_connected_forward.1} parent=1 // loop_header
      %s15 = sphi 0, %s19
      %p16 = scmp.ge.s32.totalorder %s15, 5
      %s22 = sphi 0, %s34
      %s23 = sphi 0, %s30
      %s24 = sphi 0, %s22
      %s25 = sphi 0, %s23
      %s26 = sphi 0, %s24
      %s27 = sphi 0, %s25
      %s37 = sphi 0, %s39
      %s40 = sphi 0, %s37
      %s41 = sphi 0, %s40
      %s57 = sphi 0, %s41
      %s61 = sphi 0, %s61
      %s63 = sphi 0, %s61
      %s64 = sphi 0, %s63
      %s78 = sphi 0, %s64
      %s82 = sphi 0, %s82
      %s84 = sphi 0, %s82
      %s85 = sphi 0, %s84
      %s99 = sphi 0, %s85
      %s111 = sphi 0, %s113
      %s114 = sphi 0, %s111
      %s115 = sphi 0, %s114
      %s131 = sphi 0, %s115
      %s143 = sphi 0, %s145
      %s146 = sphi 0, %s143
      %s147 = sphi 0, %s146
      %s163 = sphi 0, %s147
      %s169 = sphi 0, %s171
      %s172 = sphi 0, %s169
      %s173 = sphi 0, %s172
      %s189 = sphi 0, %s173
    $region4: #{fully_connected_forward.1} parent=1 // loop_header_branch
      %18 = sbr.rel (%p16) target = $region8
    $region5: #{fully_connected_forward.1} parent=1 // loop_body
      %s20 = ssub.s32 %s15, 1
      %s21 = ssub.s32 %s15, 2
      %s28 = sadd.s32 1, %s23
      %p29 = scmp.ge.s32.totalorder %s28, 3
      %s30 = scalar_select %p29, 0, %s28
      %s31 = sadd.s32 1, %s22
      %s32 = scalar_select %p29, %s31, %s22
      %p33 = scmp.ge.s32.totalorder %s32, 1
      %s34 = scalar_select %p33, 0, %s32
      %s35 = ssub.s32 %s22, %s34
      %p36 = scmp.eq.s32.totalorder %s35, 0
      %s38 = sadd.s32 %s37, 1
      %s39 = scalar_select %p36, %s37, %s38
      %p42 = pneg %p36
      %p43 = scmp.eq.s32.totalorder %s15, 2
      %p44 = por %p42, %p43
      %p45 = scmp.ne.s32.totalorder %s37, %s40
      %p46 = scmp.eq.s32.totalorder %s15, 0
      %p47 = por %p45, %p46
      %p48 = scmp.ne.s32.totalorder %s37, %s40
      %p49 = scmp.eq.s32.totalorder %s20, 2
      %p50 = por %p48, %p49
      %p51 = scmp.ne.s32.totalorder %s40, %s41
      %p52 = scmp.eq.s32.totalorder %s20, 0
      %p53 = por %p51, %p52
      %p54 = scmp.ne.s32.totalorder %s40, %s41
      %p55 = scmp.eq.s32.totalorder %s21, 2
      %p56 = por %p54, %p55
      %p58 = scmp.ne.s32.totalorder %s41, %s57
      %p59 = scmp.eq.s32.totalorder %s21, 0
      %p60 = por %p58, %p59
      %s62 = sadd.s32 %s61, 1
      %p65 = scmp.eq.s32.totalorder %s15, 2
      %p66 = scmp.ne.s32.totalorder %s61, %s63
      %p67 = scmp.eq.s32.totalorder %s15, 0
      %p68 = por %p66, %p67
      %p69 = scmp.ne.s32.totalorder %s61, %s63
      %p70 = scmp.eq.s32.totalorder %s20, 2
      %p71 = por %p69, %p70
      %p72 = scmp.ne.s32.totalorder %s63, %s64
      %p73 = scmp.eq.s32.totalorder %s20, 0
      %p74 = por %p72, %p73
      %p75 = scmp.ne.s32.totalorder %s63, %s64
      %p76 = scmp.eq.s32.totalorder %s21, 2
      %p77 = por %p75, %p76
      %p79 = scmp.ne.s32.totalorder %s64, %s78
      %p80 = scmp.eq.s32.totalorder %s21, 0
      %p81 = por %p79, %p80
      %s83 = sadd.s32 %s82, 1
      %p86 = scmp.eq.s32.totalorder %s15, 2
      %p87 = scmp.ne.s32.totalorder %s82, %s84
      %p88 = scmp.eq.s32.totalorder %s15, 0
      %p89 = por %p87, %p88
      %p90 = scmp.ne.s32.totalorder %s82, %s84
      %p91 = scmp.eq.s32.totalorder %s20, 2
      %p92 = por %p90, %p91
      %p93 = scmp.ne.s32.totalorder %s84, %s85
      %p94 = scmp.eq.s32.totalorder %s20, 0
      %p95 = por %p93, %p94
      %p96 = scmp.ne.s32.totalorder %s84, %s85
      %p97 = scmp.eq.s32.totalorder %s21, 2
      %p98 = por %p96, %p97
      %p100 = scmp.ne.s32.totalorder %s85, %s99
      %p101 = scmp.eq.s32.totalorder %s21, 0
      %p102 = por %p100, %p101
      %s103 = ssub.s32 %s23, 1
      %p104 = scmp.gt.s32.totalorder %s103, 0
      %s105 = scalar_select %p104, %s103, 0
      %s106 = ssub.s32 %s30, 1
      %p107 = scmp.gt.s32.totalorder %s106, 0
      %s108 = scalar_select %p107, %s106, 0
      %s109 = ssub.s32 %s105, %s108
      %p110 = scmp.eq.s32.totalorder %s109, 0
      %s112 = sadd.s32 %s111, 1
      %s113 = scalar_select %p110, %s111, %s112
      %p116 = pneg %p110
      %p117 = scmp.eq.s32.totalorder %s15, 2
      %p118 = por %p116, %p117
      %p119 = scmp.ne.s32.totalorder %s111, %s114
      %p120 = scmp.eq.s32.totalorder %s15, 0
      %p121 = por %p119, %p120
      %p122 = scmp.ne.s32.totalorder %s111, %s114
      %p123 = scmp.eq.s32.totalorder %s20, 2
      %p124 = por %p122, %p123
      %p125 = scmp.ne.s32.totalorder %s114, %s115
      %p126 = scmp.eq.s32.totalorder %s20, 0
      %p127 = por %p125, %p126
      %p128 = scmp.ne.s32.totalorder %s114, %s115
      %p129 = scmp.eq.s32.totalorder %s21, 2
      %p130 = por %p128, %p129
      %p132 = scmp.ne.s32.totalorder %s115, %s131
      %p133 = scmp.eq.s32.totalorder %s21, 0
      %p134 = por %p132, %p133
      %s135 = ssub.s32 %s23, 1
      %p136 = scmp.gt.s32.totalorder %s135, 0
      %s137 = scalar_select %p136, %s135, 0
      %s138 = ssub.s32 %s30, 1
      %p139 = scmp.gt.s32.totalorder %s138, 0
      %s140 = scalar_select %p139, %s138, 0
      %s141 = ssub.s32 %s137, %s140
      %p142 = scmp.eq.s32.totalorder %s141, 0
      %s144 = sadd.s32 %s143, 1
      %s145 = scalar_select %p142, %s143, %s144
      %p148 = pneg %p142
      %p149 = scmp.eq.s32.totalorder %s15, 2
      %p150 = por %p148, %p149
      %p151 = scmp.ne.s32.totalorder %s143, %s146
      %p152 = scmp.eq.s32.totalorder %s15, 0
      %p153 = por %p151, %p152
      %p154 = scmp.ne.s32.totalorder %s143, %s146
      %p155 = scmp.eq.s32.totalorder %s20, 2
      %p156 = por %p154, %p155
      %p157 = scmp.ne.s32.totalorder %s146, %s147
      %p158 = scmp.eq.s32.totalorder %s20, 0
      %p159 = por %p157, %p158
      %p160 = scmp.ne.s32.totalorder %s146, %s147
      %p161 = scmp.eq.s32.totalorder %s21, 2
      %p162 = por %p160, %p161
      %p164 = scmp.ne.s32.totalorder %s147, %s163
      %p165 = scmp.eq.s32.totalorder %s21, 0
      %p166 = por %p164, %p165
      %s167 = ssub.s32 %s22, %s34
      %p168 = scmp.eq.s32.totalorder %s167, 0
      %s170 = sadd.s32 %s169, 1
      %s171 = scalar_select %p168, %s169, %s170
      %p174 = pneg %p168
      %p175 = scmp.eq.s32.totalorder %s15, 2
      %p176 = por %p174, %p175
      %p177 = scmp.ne.s32.totalorder %s169, %s172
      %p178 = scmp.eq.s32.totalorder %s15, 0
      %p179 = por %p177, %p178
      %p180 = scmp.ne.s32.totalorder %s169, %s172
      %p181 = scmp.eq.s32.totalorder %s20, 2
      %p182 = por %p180, %p181
      %p183 = scmp.ne.s32.totalorder %s172, %s173
      %p184 = scmp.eq.s32.totalorder %s20, 0
      %p185 = por %p183, %p184
      %p186 = scmp.ne.s32.totalorder %s172, %s173
      %p187 = scmp.eq.s32.totalorder %s21, 2
      %p188 = por %p186, %p187
      %p190 = scmp.ne.s32.totalorder %s173, %s189
      %p191 = scmp.eq.s32.totalorder %s21, 0
      %p192 = por %p190, %p191
      %p193 = scmp.le.s32.totalorder 1, %s15
      %p194 = scmp.lt.s32.totalorder %s15, 4
      %p195 = pnand %p193, %p194
      %p196 = pneg %p195
      // Predicated region
      $region9: #{fully_connected_forward.1} parent=5 // pred_check
        _
      $region10: #{fully_connected_forward.1} parent=5 // pred_check_branch
        %198 = sbr.rel (%p195) target = $region12
      $region11: #{fully_connected_forward.1} parent=5 // pred_region
        %s199 = ssub.s32 %s15, 1
        // Predicated region
        $region13: #{fully_connected_forward.1} parent=11 // pred_check
          %p200 = pneg %p53
        $region14: #{fully_connected_forward.1} parent=11 // pred_check_branch
          %202 = sbr.rel (%p200) target = $region16
        $region15: #{fully_connected_forward.1} parent=11 // pred_region
          %s203 = smul.u32 2, %s24
          %p204 = scmp.lt.s32.totalorder %s203, 1
          %s205 = scalar_select %p204, %s203, 1
          %s206 = smul.addr %s205, 4
          %s207 = scalar_lea.vmem %s0, %s206
          %s208 = smul.u32 2, %s24
        $region16: #{fully_connected_forward.1} parent=11 // pred_fallthru
          _
        // Predicated region
        $region17: #{fully_connected_forward.1} parent=11 // pred_check
          %p209 = pneg %p74
        $region18: #{fully_connected_forward.1} parent=11 // pred_check_branch
          %211 = sbr.rel (%p209) target = $region20
        $region19: #{fully_connected_forward.1} parent=11 // pred_region
          %213 = vsyncadd [#allocation4], 0
          %s214 = sshll.u32 %s1, 4
          %s215 = int_to_ptr.hbm [resolvable:$true] %s214
          %s216 = sshll.u32 [#allocation3], 4
          %s217 = int_to_ptr.vmem [resolvable:$true] %s216
          %222 = dma.hbm_to_vmem [thread:$0]  %s215, 1024, %s217, [#allocation4], 64, 64, 4
        $region20: #{fully_connected_forward.1} parent=11 // pred_fallthru
          _
        // Predicated region
        $region21: #{fully_connected_forward.1} parent=11 // pred_check
          %p223 = pneg %p95
        $region22: #{fully_connected_forward.1} parent=11 // pred_check_branch
          %225 = sbr.rel (%p223) target = $region24
        $region23: #{fully_connected_forward.1} parent=11 // pred_region
          _
        $region24: #{fully_connected_forward.1} parent=11 // pred_fallthru
          _
      $region12: #{fully_connected_forward.1} parent=5 // pred_fallthru
        _
      %p226 = scmp.lt.s32.totalorder %s15, 3
      // Predicated region
      $region25: #{fully_connected_forward.1} parent=5 // pred_check
        %p227 = pneg %p226
      $region26: #{fully_connected_forward.1} parent=5 // pred_check_branch
        %229 = sbr.rel (%p227) target = $region28
      $region27: #{fully_connected_forward.1} parent=5 // pred_region
        // Predicated region
        $region29: #{fully_connected_forward.1} parent=27 // pred_check
          %p230 = pneg %p121
        $region30: #{fully_connected_forward.1} parent=27 // pred_check_branch
          %232 = sbr.rel (%p230) target = $region32
        $region31: #{fully_connected_forward.1} parent=27 // pred_region
          %s233 = sand.u32 %s111, 1
          %s234 = scalar_lea.sflag [#allocation6], %s233
          %s235 = sand.u32 %s111, 1
          %s236 = smul.addr %s235, 64
          %s237 = scalar_lea.vmem [#allocation5], %s236
          %s238 = ssub.s32 %s23, 1
          %p239 = scmp.gt.s32.totalorder %s238, 0
          %s240 = scalar_select %p239, %s238, 0
          %242 = vsyncadd %s234, 0
          %s243 = smul.addr %s240, 16
          %s244 = smul.addr %s243, 4
          %s245 = scalar_lea.hbm %s3, %s244
          %s246 = sshll.u32 %s245, 4
          %s247 = int_to_ptr.hbm [resolvable:$true] %s246
          %s248 = sshll.u32 %s237, 4
          %s249 = int_to_ptr.vmem [resolvable:$true] %s248
          %254 = dma.hbm_to_vmem [thread:$0]  %s247, 1024, %s249, %s234, 64, 64, 4
        $region32: #{fully_connected_forward.1} parent=27 // pred_fallthru
          _
        // Predicated region
        $region33: #{fully_connected_forward.1} parent=27 // pred_check
          %p255 = pneg %p153
        $region34: #{fully_connected_forward.1} parent=27 // pred_check_branch
          %257 = sbr.rel (%p255) target = $region36
        $region35: #{fully_connected_forward.1} parent=27 // pred_region
          %s258 = ssub.s32 %s23, 1
          %p259 = scmp.gt.s32.totalorder %s258, 0
          %s260 = scalar_select %p259, %s258, 0
          %p261 = scmp.lt.s32.totalorder %s260, 1
          %s262 = scalar_select %p261, %s260, 1
          %s263 = scalar_lea.vmem %s4, %s262
          %s264 = ssub.s32 %s23, 1
          %p265 = scmp.gt.s32.totalorder %s264, 0
          %s266 = scalar_select %p265, %s264, 0
        $region36: #{fully_connected_forward.1} parent=27 // pred_fallthru
          _
      $region28: #{fully_connected_forward.1} parent=5 // pred_fallthru
        _
      %p267 = scmp.le.s32.totalorder 1, %s15
      %p268 = scmp.lt.s32.totalorder %s15, 4
      %p269 = pnand %p267, %p268
      %p270 = pneg %p269
      // Predicated region
      $region37: #{fully_connected_forward.1} parent=5 // pred_check
        _
      $region38: #{fully_connected_forward.1} parent=5 // pred_check_branch
        %272 = sbr.rel (%p269) target = $region40
      $region39: #{fully_connected_forward.1} parent=5 // pred_region
        %s273 = ssub.s32 %s15, 1
        // Predicated region
        $region41: #{fully_connected_forward.1} parent=39 // pred_check
          %p274 = pneg %p74
        $region42: #{fully_connected_forward.1} parent=39 // pred_check_branch
          %276 = sbr.rel (%p274) target = $region44
        $region43: #{fully_connected_forward.1} parent=39 // pred_region
          %278 = dma.done [#allocation4], 1024
        $region44: #{fully_connected_forward.1} parent=39 // pred_fallthru
          _
        %s279 = sand.u32 %s114, 1
        %s280 = scalar_lea.sflag [#allocation6], %s279
        %s281 = sand.u32 %s114, 1
        %s282 = smul.addr %s281, 64
        %s283 = scalar_lea.vmem [#allocation5], %s282
        // Predicated region
        $region45: #{fully_connected_forward.1} parent=39 // pred_check
          %p284 = pneg %p127
        $region46: #{fully_connected_forward.1} parent=39 // pred_check_branch
          %286 = sbr.rel (%p284) target = $region48
        $region47: #{fully_connected_forward.1} parent=39 // pred_region
          %288 = dma.done %s280, 1024
        $region48: #{fully_connected_forward.1} parent=39 // pred_fallthru
          _
        %s289 = smul.u32 2, %s24
        %p290 = scmp.lt.s32.totalorder %s289, 1
        %s291 = scalar_select %p290, %s289, 1
        %s292 = smul.addr %s291, 4
        %s293 = scalar_lea.vmem %s0, %s292
        %p294 = pneg %p53
        %p295 = pneg %p50
        %p296 = pneg %p74
        %p297 = pneg %p71
        %p298 = pneg %p95
        %p299 = pneg %p92
        %s300 = sand.u32 %s114, 1
        %s301 = scalar_lea.sflag [#allocation6], %s300
        %s302 = sand.u32 %s114, 1
        %s303 = smul.addr %s302, 64
        %s304 = scalar_lea.vmem [#allocation5], %s303
        %p305 = pneg %p127
        %p306 = pneg %p124
        %s307 = ssub.s32 %s25, 1
        %p308 = scmp.gt.s32.totalorder %s307, 0
        %s309 = scalar_select %p308, %s307, 0
        %p310 = scmp.lt.s32.totalorder %s309, 1
        %s311 = scalar_select %p310, %s309, 1
        %s312 = scalar_lea.vmem %s4, %s311
        %p313 = pneg %p159
        %p314 = pneg %p156
        %p315 = pneg %p185
        %p316 = pneg %p182
        %s317 = smul.u32 2, %s24
        %p318 = scmp.lt.s32.totalorder %s317, 1
        %s319 = scalar_select %p318, %s317, 1
        %s320 = smul.addr %s319, 8
        %s321 = scalar_lea.vmem %s5, %s320
        %s322 = smul.u32 2, %s24
        %p323 = scmp.lt.s32.totalorder %s322, 1
        %s324 = scalar_select %p323, %s322, 1
        %s325 = smul.addr %s324, 4
        %s326 = scalar_lea.vmem %s0, %s325
        %s327 = smul.u32 2, %s24
        %s328 = ssub.s32 %s25, 1
        %p329 = scmp.gt.s32.totalorder %s328, 0
        %s330 = scalar_select %p329, %s328, 0
        %s331 = ssub.s32 %s25, 1
        %p332 = scmp.gt.s32.totalorder %s331, 0
        %s333 = scalar_select %p332, %s331, 0
        %p334 = scmp.lt.s32.totalorder %s333, 1
        %s335 = scalar_select %p334, %s333, 1
        %s336 = scalar_lea.vmem %s4, %s335
        %s337 = ssub.s32 %s25, 1
        %p338 = scmp.gt.s32.totalorder %s337, 0
        %s339 = scalar_select %p338, %s337, 0
        %s340 = smul.u32 2, %s24
        %p341 = scmp.lt.s32.totalorder %s340, 1
        %s342 = scalar_select %p341, %s340, 1
        %s343 = smul.addr %s342, 8
        %s344 = scalar_lea.vmem %s5, %s343
        %s345 = smul.u32 2, %s24
        %p346 = scmp.eq.s32.totalorder %s25, 0
        // Predicated region
        $region49: #{fully_connected_forward.1} parent=39 // pred_check
          %p347 = pneg %p346
        $region50: #{fully_connected_forward.1} parent=39 // pred_check_branch
          %349 = sbr.rel (%p347) target = $region52
        $region51: #{fully_connected_forward.1} parent=39 // pred_region
          %v350 = vld [vmem:[%s326] sm:$0xf]
          %v351 = vld [vmem:[%s326 + $0x4] sm:$0xf]
          %v352 = vld [vmem:[#allocation3] sm:$0xf]
          %v353 = vld [vmem:[#allocation3 + $0x4] sm:$0xf]
          %v354 = vld [vmem:[#allocation3 + $0x8] sm:$0xf]
          %v355 = vld [vmem:[#allocation3 + $0xc] sm:$0xf]
          %v356 = vld [vmem:[#allocation3 + $0x10] sm:$0xf]
          %v357 = vld [vmem:[#allocation3 + $0x14] sm:$0xf]
          %v358 = vld [vmem:[#allocation3 + $0x18] sm:$0xf]
          %v359 = vld [vmem:[#allocation3 + $0x1c] sm:$0xf]
          %v360 = vld [vmem:[#allocation3 + $0x20] sm:$0xf]
          %v361 = vld [vmem:[#allocation3 + $0x24] sm:$0xf]
          %v362 = vld [vmem:[#allocation3 + $0x28] sm:$0xf]
          %v363 = vld [vmem:[#allocation3 + $0x2c] sm:$0xf]
          %v364 = vld [vmem:[#allocation3 + $0x30] sm:$0xf]
          %v365 = vld [vmem:[#allocation3 + $0x34] sm:$0xf]
          %v366 = vld [vmem:[#allocation3 + $0x38] sm:$0xf]
          %v367 = vld [vmem:[#allocation3 + $0x3c] sm:$0xf]
          %v368 = vld [vmem:[%s2] sm:$0x1]
          %v370 = vperm.slane %v368, 0
          %v374 = vunpack.c.l.b16 %v350
          %v375 = vunpack.c.l.b16 %v351
          %v376 = vpack.c.b16 %v375, %v374
          %v394 = vunpack.c.l.b16 %v352
          %v395 = vunpack.c.l.b16 %v353
          %v396 = vunpack.c.l.b16 %v354
          %v397 = vunpack.c.l.b16 %v355
          %v398 = vunpack.c.l.b16 %v356
          %v399 = vunpack.c.l.b16 %v357
          %v400 = vunpack.c.l.b16 %v358
          %v401 = vunpack.c.l.b16 %v359
          %v402 = vunpack.c.l.b16 %v360
          %v403 = vunpack.c.l.b16 %v361
          %v404 = vunpack.c.l.b16 %v362
          %v405 = vunpack.c.l.b16 %v363
          %v406 = vunpack.c.l.b16 %v364
          %v407 = vunpack.c.l.b16 %v365
          %v408 = vunpack.c.l.b16 %v366
          %v409 = vunpack.c.l.b16 %v367
          %v410 = vpack.c.b16 %v395, %v394
          %v411 = vpack.c.b16 %v397, %v396
          %v412 = vpack.c.b16 %v399, %v398
          %v413 = vpack.c.b16 %v401, %v400
          %v414 = vpack.c.b16 %v403, %v402
          %v415 = vpack.c.b16 %v405, %v404
          %v416 = vpack.c.b16 %v407, %v406
          %v417 = vpack.c.b16 %v409, %v408
          %426 = vmatpush.bf16.msra.mxu0 %v417
          %427 = vmatpush.bf16.msra.mxu0 %v416
          %428 = vmatpush.bf16.msra.mxu0 %v415
          %429 = vmatpush.bf16.msra.mxu0 %v414
          %430 = vmatpush.bf16.msra.mxu0 %v413
          %431 = vmatpush.bf16.msra.mxu0 %v412
          %432 = vmatpush.bf16.msra.mxu0 %v411
          %433 = vmatpush.bf16.msra.mxu0 %v410
          %434 = vmatmul.bf16.gmra.mxu0 %v376
          %v435 = vpop.f32.mrf.mxu0
          %v436 = vadd.f32 %v370, %v435
          %v437 = vpop.f32.mrf.mxu0
          %v438 = vadd.f32 %v370, %v437
          %439 = vdwg.mxu0
          %v440 = vmax.f32 %v436, 0.0
          %v441 = vmax.f32 %v438, 0.0
          %v442 = vpack.c.bf16 %v440, %v440
          %v443 = vpack.c.bf16 %v441, %v441
          %444 = vst [vmem:[#allocation2] sm:$0xf] %v442
          %445 = vst [vmem:[#allocation2 + $0x4] sm:$0xf] %v443
          %p446 = scmp.eq.s32.totalorder %s25, 2
          // Predicated region
          $region53: #{fully_connected_forward.1} parent=51 // pred_check
            %p447 = pneg %p446
          $region54: #{fully_connected_forward.1} parent=51 // pred_check_branch
            %449 = sbr.rel (%p447) target = $region56
          $region55: #{fully_connected_forward.1} parent=51 // pred_region
            %450 = vst [vmem:[%s344] sm:$0xff] %v440
            %451 = vst [vmem:[%s344 + $0x8] sm:$0xff] %v441
          $region56: #{fully_connected_forward.1} parent=51 // pred_fallthru
            _
        $region52: #{fully_connected_forward.1} parent=39 // pred_fallthru
          _
        %p452 = scmp.gt.s32.totalorder %s25, 0
        // Predicated region
        $region57: #{fully_connected_forward.1} parent=39 // pred_check
          %p453 = pneg %p452
        $region58: #{fully_connected_forward.1} parent=39 // pred_check_branch
          %455 = sbr.rel (%p453) target = $region60
        $region59: #{fully_connected_forward.1} parent=39 // pred_region
          %v456 = vld [vmem:[#allocation2] sm:$0xf]
          %v457 = vld [vmem:[#allocation2 + $0x4] sm:$0xf]
          %v458 = vld [vmem:[%s283] sm:$0xf]
          %v459 = vld [vmem:[%s283 + $0x4] sm:$0xf]
          %v460 = vld [vmem:[%s283 + $0x8] sm:$0xf]
          %v461 = vld [vmem:[%s283 + $0xc] sm:$0xf]
          %v462 = vld [vmem:[%s283 + $0x10] sm:$0xf]
          %v463 = vld [vmem:[%s283 + $0x14] sm:$0xf]
          %v464 = vld [vmem:[%s283 + $0x18] sm:$0xf]
          %v465 = vld [vmem:[%s283 + $0x1c] sm:$0xf]
          %v466 = vld [vmem:[%s283 + $0x20] sm:$0xf]
          %v467 = vld [vmem:[%s283 + $0x24] sm:$0xf]
          %v468 = vld [vmem:[%s283 + $0x28] sm:$0xf]
          %v469 = vld [vmem:[%s283 + $0x2c] sm:$0xf]
          %v470 = vld [vmem:[%s283 + $0x30] sm:$0xf]
          %v471 = vld [vmem:[%s283 + $0x34] sm:$0xf]
          %v472 = vld [vmem:[%s283 + $0x38] sm:$0xf]
          %v473 = vld [vmem:[%s283 + $0x3c] sm:$0xf]
          %v474 = vld [vmem:[%s336] sm:$0x1]
          %v476 = vperm.slane %v474, 0
          %v480 = vunpack.c.l.b16 %v456
          %v481 = vunpack.c.l.b16 %v457
          %v482 = vpack.c.b16 %v481, %v480
          %v500 = vunpack.c.l.b16 %v458
          %v501 = vunpack.c.l.b16 %v459
          %v502 = vunpack.c.l.b16 %v460
          %v503 = vunpack.c.l.b16 %v461
          %v504 = vunpack.c.l.b16 %v462
          %v505 = vunpack.c.l.b16 %v463
          %v506 = vunpack.c.l.b16 %v464
          %v507 = vunpack.c.l.b16 %v465
          %v508 = vunpack.c.l.b16 %v466
          %v509 = vunpack.c.l.b16 %v467
          %v510 = vunpack.c.l.b16 %v468
          %v511 = vunpack.c.l.b16 %v469
          %v512 = vunpack.c.l.b16 %v470
          %v513 = vunpack.c.l.b16 %v471
          %v514 = vunpack.c.l.b16 %v472
          %v515 = vunpack.c.l.b16 %v473
          %v516 = vpack.c.b16 %v501, %v500
          %v517 = vpack.c.b16 %v503, %v502
          %v518 = vpack.c.b16 %v505, %v504
          %v519 = vpack.c.b16 %v507, %v506
          %v520 = vpack.c.b16 %v509, %v508
          %v521 = vpack.c.b16 %v511, %v510
          %v522 = vpack.c.b16 %v513, %v512
          %v523 = vpack.c.b16 %v515, %v514
          %532 = vmatpush.bf16.msra.mxu0 %v523
          %533 = vmatpush.bf16.msra.mxu0 %v522
          %534 = vmatpush.bf16.msra.mxu0 %v521
          %535 = vmatpush.bf16.msra.mxu0 %v520
          %536 = vmatpush.bf16.msra.mxu0 %v519
          %537 = vmatpush.bf16.msra.mxu0 %v518
          %538 = vmatpush.bf16.msra.mxu0 %v517
          %539 = vmatpush.bf16.msra.mxu0 %v516
          %540 = vmatmul.bf16.gmra.mxu0 %v482
          %v541 = vpop.f32.mrf.mxu0
          %v542 = vadd.f32 %v476, %v541
          %v543 = vpop.f32.mrf.mxu0
          %v544 = vadd.f32 %v476, %v543
          %545 = vdwg.mxu0
          %v546 = vmax.f32 %v542, 0.0
          %v547 = vmax.f32 %v544, 0.0
          %v548 = vpack.c.bf16 %v546, %v546
          %v549 = vpack.c.bf16 %v547, %v547
          %550 = vst [vmem:[#allocation2] sm:$0xf] %v548
          %551 = vst [vmem:[#allocation2 + $0x4] sm:$0xf] %v549
          %p552 = scmp.eq.s32.totalorder %s25, 2
          // Predicated region
          $region61: #{fully_connected_forward.1} parent=59 // pred_check
            %p553 = pneg %p552
          $region62: #{fully_connected_forward.1} parent=59 // pred_check_branch
            %555 = sbr.rel (%p553) target = $region64
          $region63: #{fully_connected_forward.1} parent=59 // pred_region
            %556 = vst [vmem:[%s344] sm:$0xff] %v546
            %557 = vst [vmem:[%s344 + $0x8] sm:$0xff] %v547
          $region64: #{fully_connected_forward.1} parent=59 // pred_fallthru
            _
        $region60: #{fully_connected_forward.1} parent=39 // pred_fallthru
          _
        %s558 = smul.u32 2, %s24
        %p559 = scmp.lt.s32.totalorder %s558, 1
        %s560 = scalar_select %p559, %s558, 1
        %s561 = smul.addr %s560, 8
        %s562 = scalar_lea.vmem %s5, %s561
        // Predicated region
        $region65: #{fully_connected_forward.1} parent=39 // pred_check
          %p563 = pneg %p182
        $region66: #{fully_connected_forward.1} parent=39 // pred_check_branch
          %565 = sbr.rel (%p563) target = $region68
        $region67: #{fully_connected_forward.1} parent=39 // pred_region
          %s566 = smul.u32 2, %s24
        $region68: #{fully_connected_forward.1} parent=39 // pred_fallthru
          _
        // Predicated region
        $region69: #{fully_connected_forward.1} parent=39 // pred_check
          %p567 = pneg %p182
        $region70: #{fully_connected_forward.1} parent=39 // pred_check_branch
          %569 = sbr.rel (%p567) target = $region72
        $region71: #{fully_connected_forward.1} parent=39 // pred_region
          %s570 = smul.u32 2, %s24
          %p571 = scmp.lt.s32.totalorder %s570, 1
          %s572 = scalar_select %p571, %s570, 1
          %s573 = smul.addr %s572, 8
          %s574 = scalar_lea.vmem %s5, %s573
        $region72: #{fully_connected_forward.1} parent=39 // pred_fallthru
          _
      $region40: #{fully_connected_forward.1} parent=5 // pred_fallthru
        _
      %p575 = scmp.le.s32.totalorder 2, %s15
      // Predicated region
      $region73: #{fully_connected_forward.1} parent=5 // pred_check
        %p576 = pneg %p575
      $region74: #{fully_connected_forward.1} parent=5 // pred_check_branch
        %578 = sbr.rel (%p576) target = $region76
      $region75: #{fully_connected_forward.1} parent=5 // pred_region
        %s579 = ssub.s32 %s15, 2
      $region76: #{fully_connected_forward.1} parent=5 // pred_fallthru
        _
    $region6: #{fully_connected_forward.1} parent=1 // loop_footer
      %s19 = sadd.s32 1, %s15
    $region7: #{fully_connected_forward.1} parent=1 // loop_footer_branch
      %14 = sbr.rel target = $region3
    $region8: #{fully_connected_forward.1} parent=1 // loop_exit
      _
    %580 = vsyncpa [#allocation4], 1
    %s581 = scalar_lea.sflag [#allocation4], 1
    %582 = vsyncpa %s581, 1
    %583 = vsyncpa [#allocation6], 1
    %s584 = scalar_lea.sflag [#allocation6], 1
    %585 = vsyncpa %s584, 1

</llo_original>
